<compile_context>
chip_gen: v5e
topology: v5e:2x2
jax: 0.10.0
libtpu: 0.0.40
codegen_flags: <defaults>
</compile_context>

<pallas_src>
import jax
import jax.numpy as jnp
from jax.experimental import pallas as pl
from jax.experimental.pallas import tpu as pltpu


def _round_up(a, m):
    return ((a + m - 1) // m) * m


def _cdiv(a, b):
    return -(-a // b)


def predictor_kernel(x_ref, w1_ref, b1_ref, w2t_ref, b2_ref, o_ref):
    # x_ref : (tm, Dp)      packed input rows (R original rows per 128-lane row)
    # w1_ref: (Dp, R*H)     block-diagonal first-layer weight (resident)
    # b1_ref: (1, R*H)      f32 tiled first-layer bias (resident)
    # w2t_ref: (R, R*H)     f32 block-diagonal second-layer row weights (resident)
    # b2_ref: (1,)          f32 scalar bias in SMEM
    # o_ref : (1, R, tm)    lane-dense output block
    h = jnp.dot(x_ref[...], w1_ref[...], preferred_element_type=jnp.float32)
    h = jnp.maximum(h + b1_ref[...], 0.0)  # bias + ReLU, f32 on the VPU
    # TODO(synk): dropout_rate=0.0 -> identity; stochastic dropout not emitted.
    # Second layer has out_features == 1 per original row. Swap the operands so
    # the contraction over the hidden axis yields a lane-dense (R, tm) result.
    y = jax.lax.dot_general(
        w2t_ref[...], h, (((1,), (1,)), ((), ())),
        preferred_element_type=jnp.float32)
    o_ref[...] = (y + b2_ref[0])[None, :, :].astype(o_ref.dtype)


def predictor_forward(x, w1, b1, w2, b2, *, block_b=8192):
    """MLP head: squeeze(relu(x @ w1 + b1) @ w2 + b2).

    x: (B, D) f32/bf16; w1: (D, H) f32/bf16; b1: (H,)/(1,H); w2: (H,)/(1,H); b2: (1,).
    b1/w2/b2 are always used in f32 (tiny resident constants).
    """
    B, D = x.shape
    H = w1.shape[1]
    b1 = jnp.asarray(b1, jnp.float32).reshape(1, H)
    w2 = jnp.asarray(w2, jnp.float32).reshape(H)
    b2 = jnp.asarray(b2, jnp.float32).reshape(1)

    # ---- Pack R = 128 // D original rows into one 128-lane row (free reshape). ----
    R = 128 // D if (D < 128 and 128 % D == 0) else 1
    Bp = _round_up(B, R)
    if Bp != B:
        # Only the ragged-w.r.t.-R remainder is padded (<= R-1 rows); tile-level
        # raggedness is handled by overhanging final blocks, not host padding.
        x = jnp.pad(x, ((0, Bp - B), (0, 0)))
    Dp = R * D
    Bq = Bp // R
    xq = x.reshape(Bq, Dp)  # metadata-only reshape, no HBM copy

    # Packed (block-diagonal) weights; built once per trace, tiny (<=256 KB).
    if R > 1:
        eye_w = jnp.eye(R, dtype=w1.dtype)
        w1p = jnp.einsum("rs,dh->rdsh", eye_w, w1).reshape(Dp, R * H)
        eye_f = jnp.eye(R, dtype=jnp.float32)
        w2t = jnp.einsum("rs,h->rsh", eye_f, w2).reshape(R, R * H)
        b1p = jnp.tile(b1, (1, R))
    else:
        w1p, w2t, b1p = w1, w2[None, :], b1

    # ---- Batch tiling: big tiles (HBM-BW bound), >=2 grid steps when worthwhile. ----
    if Bq < 8:
        tm = Bq  # single tiny tile; block dim == full array dim is legal
    else:
        max_tile = max(8, (block_b // R) // 8 * 8)
        tm = min(max_tile, (Bq // 8) * 8)
        if _cdiv(Bq, tm) == 1 and Bq >= 1024:
            # v7x has 2 TensorCores: make sure the "parallel" axis has >= 2 steps.
            tm = _round_up(_cdiv(Bq, 2), 8)
    nq = _cdiv(Bq, tm)

    out = pl.pallas_call(
        predictor_kernel,
        out_shape=jax.ShapeDtypeStruct((nq, R, tm), jnp.float32),
        grid_spec=pltpu.PrefetchScalarGridSpec(
            num_scalar_prefetch=0,
            grid=(nq,),
            in_specs=[
                pl.BlockSpec((tm, Dp), lambda i: (i, 0)),            # x: tiled over batch
                pl.BlockSpec((Dp, R * H), lambda i: (0, 0)),         # packed w1: resident
                pl.BlockSpec((1, R * H), lambda i: (0, 0)),          # packed b1: resident
                pl.BlockSpec((R, R * H), lambda i: (0, 0)),          # packed w2 rows: resident
                pl.BlockSpec(memory_space=pltpu.MemorySpace.SMEM),   # b2 scalar in SMEM
            ],
            out_specs=pl.BlockSpec((1, R, tm), lambda i: (i, 0, 0)),  # lane-dense output
        ),
        compiler_params=pltpu.CompilerParams(
            dimension_semantics=("parallel",),
            vmem_limit_bytes=32 * 1024 * 1024,  # footprint is a few MB; v7x-safe
        ),
    )(xq, w1p, b1p, w2t, b2)

    # (nq, R, tm) -> (nq, tm, R) -> flat original row order; drop overhang rows.
    y = out.transpose(0, 2, 1).reshape(-1)[:B]
    # .squeeze() as in the PyTorch forward (drops all size-1 dims)
    return jnp.squeeze(y)


def init_params(key, input_dim, hidden_dim):
    k1, k2, k3, k4 = jax.random.split(key, 4)
    # Deterministic, PyTorch-like uniform init bounds (1/sqrt(fan_in))
    bound1 = 1.0 / jnp.sqrt(jnp.float32(input_dim))
    bound2 = 1.0 / jnp.sqrt(jnp.float32(hidden_dim))
    w1 = jax.random.uniform(k1, (input_dim, hidden_dim), jnp.float32, -bound1, bound1)
    b1 = jax.random.uniform(k2, (1, hidden_dim), jnp.float32, -bound1, bound1)
    w2 = jax.random.uniform(k3, (1, hidden_dim), jnp.float32, -bound2, bound2)
    b2 = jax.random.uniform(k4, (1,), jnp.float32, -bound2, bound2)
    return w1, b1, w2, b2


def _reference(x, w1, b1, w2, b2):
    return jnp.squeeze(jnp.maximum(x @ w1 + b1, 0.0) @ w2.reshape(-1, 1) + b2[0])


if __name__ == "__main__":
    key = jax.random.PRNGKey(0)
    k_x, k_p, k_x2 = jax.random.split(key, 3)

    B, D, H = 8, 32, 64  # batch, input_dim, hidden_dims=[64]
    x = jax.random.normal(k_x, (B, D), dtype=jnp.float32)
    w1, b1, w2, b2 = init_params(k_p, D, H)

    # f32 path: matches PyTorch numerics
    ref = _reference(x, w1, b1, w2, b2)
    y = jax.block_until_ready(predictor_forward(x, w1, b1, w2, b2))
    assert y.shape == (B,), y.shape
    assert jnp.allclose(y, ref, atol=2e-4, rtol=2e-4)

    # bf16 x / w1 (halves HBM->VMEM traffic), f32 accumulation; b1/w2/b2 stay f32
    y_bf16 = jax.block_until_ready(
        predictor_forward(x.astype(jnp.bfloat16), w1.astype(jnp.bfloat16), b1, w2, b2))
    assert y_bf16.shape == (B,), y_bf16.shape
    assert jnp.allclose(y_bf16, ref, atol=5e-2, rtol=5e-2)

    # Multi-tile + overhanging-final-block path (no host-side padding of x)
    B2 = 1000
    x2 = jax.random.normal(k_x2, (B2, D), dtype=jnp.float32)
    ref2 = _reference(x2, w1, b1, w2, b2)
    y2 = jax.block_until_ready(predictor_forward(x2, w1, b1, w2, b2, block_b=512))
    assert y2.shape == (B2,), y2.shape
    assert jnp.allclose(y2, ref2, atol=2e-4, rtol=2e-4)

    print("KERNEL_OK")
</pallas_src>

<mosaic_0001>
module attributes {stable_mosaic.version = 11 : i64} {
  func.func @predictor_kernel(%arg0: i32, %arg1: memref<2x128xf32, #tpu.memory_space<vmem>>, %arg2: memref<128x256xf32, #tpu.memory_space<vmem>>, %arg3: memref<1x256xf32, #tpu.memory_space<vmem>>, %arg4: memref<4x256xf32, #tpu.memory_space<vmem>>, %arg5: memref<1xf32, #tpu.memory_space<smem>>, %arg6: memref<1x4x2xf32, #tpu.memory_space<vmem>>) attributes {dimension_semantics = [#tpu.dimension_semantics<parallel>], iteration_bounds = array<i64: 1>, scalar_prefetch = 0 : i64, scratch_operands = 0 : i64, tpu.core_type = #tpu.core_type<tc>, window_params = [{transform_indices = @transform_0, window_bounds = array<i64: 2, 128>}, {pipeline_mode = #tpu.pipeline_mode<synchronous>, transform_indices = @transform_1, window_bounds = array<i64: 128, 256>}, {pipeline_mode = #tpu.pipeline_mode<synchronous>, transform_indices = @transform_2, window_bounds = array<i64: 1, 256>}, {pipeline_mode = #tpu.pipeline_mode<synchronous>, transform_indices = @transform_3, window_bounds = array<i64: 4, 256>}, {transform_indices = @transform_4, window_bounds = array<i64: 1>}, {transform_indices = @transform_5, window_bounds = array<i64: 1, 4, 2>}]} {
    %c0 = arith.constant 0 : index
    %c0_0 = arith.constant 0 : index
    %0 = vector.load %arg1[%c0, %c0_0] : memref<2x128xf32, #tpu.memory_space<vmem>>, vector<2x128xf32>
    %c0_1 = arith.constant 0 : index
    %c0_2 = arith.constant 0 : index
    %1 = vector.load %arg2[%c0_1, %c0_2] : memref<128x256xf32, #tpu.memory_space<vmem>>, vector<128x256xf32>
    %cst = arith.constant dense<0.000000e+00> : vector<2x256xf32>
    %2 = tpu.matmul %0, %1, %cst {dimension_numbers = #tpu.dot_dimension_numbers<[1], [0], [0], [1], [0, 0, 1, 1], [], []>} : vector<2x128xf32>, vector<128x256xf32>, vector<2x256xf32> -> vector<2x256xf32>
    %c0_3 = arith.constant 0 : index
    %c0_4 = arith.constant 0 : index
    %3 = vector.load %arg3[%c0_3, %c0_4] : memref<1x256xf32, #tpu.memory_space<vmem>>, vector<1x256xf32>
    %4 = vector.broadcast %3 : vector<1x256xf32> to vector<2x256xf32>
    %5 = arith.addf %2, %4 : vector<2x256xf32>
    %cst_5 = arith.constant 0.000000e+00 : f32
    %6 = vector.broadcast %cst_5 : f32 to vector<2x256xf32>
    %7 = arith.maximumf %5, %6 : vector<2x256xf32>
    %c0_6 = arith.constant 0 : index
    %c0_7 = arith.constant 0 : index
    %8 = vector.load %arg4[%c0_6, %c0_7] : memref<4x256xf32, #tpu.memory_space<vmem>>, vector<4x256xf32>
    %cst_8 = arith.constant dense<0.000000e+00> : vector<4x2xf32>
    %9 = tpu.matmul %8, %7, %cst_8 {dimension_numbers = #tpu.dot_dimension_numbers<[1], [1], [0], [0], [0, 0, 1, 0], [], []>} : vector<4x256xf32>, vector<2x256xf32>, vector<4x2xf32> -> vector<4x2xf32>
    %c0_9 = arith.constant 0 : index
    %10 = memref.load %arg5[%c0_9] : memref<1xf32, #tpu.memory_space<smem>>
    %11 = vector.broadcast %10 : f32 to vector<4x2xf32>
    %12 = arith.addf %9, %11 : vector<4x2xf32>
    %13 = vector.shape_cast %12 : vector<4x2xf32> to vector<1x4x2xf32>
    %c0_10 = arith.constant 0 : index
    %c0_11 = arith.constant 0 : index
    %c0_12 = arith.constant 0 : index
    %14 = vector.load %arg6[%c0_10, %c0_11, %c0_12] : memref<1x4x2xf32, #tpu.memory_space<vmem>>, vector<1x4x2xf32>
    tpu.vector_store %arg6[%c0_10, %c0_11, %c0_12], %13 {strides = array<i32>} : memref<1x4x2xf32, #tpu.memory_space<vmem>>, vector<1x4x2xf32>,
    return
  }
  func.func @transform_0(%arg0: i32) -> (i32, i32) {
    %c0_i32 = arith.constant 0 : i32
    %c0_i32_0 = arith.constant 0 : i32
    return %arg0, %c0_i32 : i32, i32
  }
  func.func @transform_1(%arg0: i32) -> (i32, i32) {
    %c0_i32 = arith.constant 0 : i32
    %c0_i32_0 = arith.constant 0 : i32
    %c0_i32_1 = arith.constant 0 : i32
    return %c0_i32, %c0_i32_0 : i32, i32
  }
  func.func @transform_2(%arg0: i32) -> (i32, i32) {
    %c0_i32 = arith.constant 0 : i32
    %c0_i32_0 = arith.constant 0 : i32
    %c0_i32_1 = arith.constant 0 : i32
    return %c0_i32, %c0_i32_0 : i32, i32
  }
  func.func @transform_3(%arg0: i32) -> (i32, i32) {
    %c0_i32 = arith.constant 0 : i32
    %c0_i32_0 = arith.constant 0 : i32
    %c0_i32_1 = arith.constant 0 : i32
    return %c0_i32, %c0_i32_0 : i32, i32
  }
  func.func @transform_4(%arg0: i32) -> i32 {
    %c0_i32 = arith.constant 0 : i32
    %c0_i32_0 = arith.constant 0 : i32
    return %c0_i32 : i32
  }
  func.func @transform_5(%arg0: i32) -> (i32, i32, i32) {
    %c0_i32 = arith.constant 0 : i32
    %c0_i32_0 = arith.constant 0 : i32
    %c0_i32_1 = arith.constant 0 : i32
    return %arg0, %c0_i32, %c0_i32_0 : i32, i32, i32
  }
}

</mosaic_0001>

<llo_original>
// kernel: tpu_custom_call.1
$region0: #{tpu_custom_call.1}
  #allocation0 [shape = 'u32[]', space=smem, size = 0x4, offset = 0x4, fixed_abs, tag = 'smem constant byte address 0x4 - core index']
  #allocation1 [shape = 'u32[72,128]{1,0:T(1,128)}', space=vmem, size = 0x9000, scoped, tag = 'internal scratch']
  #allocation2 [shape = 'f32[1]{0:T(128)S(6)}', space=smem, size = 0x200, scoped, tag = 'scoped memory for tpu_custom_call.1']
  %s0 = inlined_call_operand.vmem [shape: f32[2,128], index: 0, kind: input, shape index: {}]
  %s1 = inlined_call_operand.hbm [shape: f32[128,256], index: 1, kind: input, shape index: {}]
  %s2 = inlined_call_operand.hbm [shape: f32[1,256], index: 2, kind: input, shape index: {}]
  %s3 = inlined_call_operand.hbm [shape: f32[4,256], index: 3, kind: input, shape index: {}]
  %s4 = inlined_call_operand.<no memory space> [shape: f32[1], index: 4, kind: input, shape index: {}]
  %s5 = inlined_call_operand.vmem [shape: f32[1,4,2], index: 5, kind: output, shape index: {}]
  %s6 = sld [smem:[#allocation0]]
  $region42: #{tpu_custom_call.1} parent=0
    _
  %s8 = ssub.s32 1, %s6
  %s9 = scalar_select 0, %s8, %s6
  %10 = sst [smem:[#allocation2]] %s4
  $region1: #{tpu_custom_call.1} parent=0
    #allocation3 [shape = 'u8[131072]{0}', space=vmem, size = 0x20000, scoped, tag = 'input window, operand 1, single buffered']
    #allocation4 [shape = 's32[1]{0}', space=sflag, size = 0x4, scoped, tag = 'scoped memory for tpu_custom_call.1']
    #allocation5 [shape = 'u8[1024]{0}', space=vmem, size = 0x400, scoped, tag = 'input window, operand 2, single buffered']
    #allocation6 [shape = 's32[1]{0}', space=sflag, size = 0x4, scoped, tag = 'scoped memory for tpu_custom_call.1']
    #allocation7 [shape = 'u8[4096]{0}', space=vmem, size = 0x1000, scoped, tag = 'input window, operand 3, single buffered']
    %11 = vsyncpa [#allocation4], 0
    %12 = vsyncpa [#allocation6], 0
    // Predicated region
    $region2: #{tpu_custom_call.1} parent=1 // pred_check
      _
    $region3: #{tpu_custom_call.1} parent=1 // pred_check_branch
      %14 = sbr.rel (0) target = $region5
    $region4: #{tpu_custom_call.1} parent=1 // pred_region
      _
    $region5: #{tpu_custom_call.1} parent=1 // pred_fallthru
      _
    // Predicated region
    $region6: #{tpu_custom_call.1} parent=1 // pred_check
      _
    $region7: #{tpu_custom_call.1} parent=1 // pred_check_branch
      %16 = sbr.rel (0) target = $region9
    $region8: #{tpu_custom_call.1} parent=1 // pred_region
      %18 = vsyncadd [#allocation4], 0
      %s19 = sshll.u32 %s1, 4
      %s20 = int_to_ptr.hbm [resolvable:$true] %s19
      %s21 = sshll.u32 [#allocation3], 4
      %s22 = int_to_ptr.vmem [resolvable:$true] %s21
      %27 = dma.hbm_to_vmem [thread:$0]  %s20, 4096, %s22, [#allocation4], 256, 256, 16
    $region9: #{tpu_custom_call.1} parent=1 // pred_fallthru
      _
    // Predicated region
    $region10: #{tpu_custom_call.1} parent=1 // pred_check
      _
    $region11: #{tpu_custom_call.1} parent=1 // pred_check_branch
      %29 = sbr.rel (0) target = $region13
    $region12: #{tpu_custom_call.1} parent=1 // pred_region
      %31 = vsyncadd [#allocation6], 0
      %s33 = sshll.u32 %s2, 4
      %s34 = int_to_ptr.hbm [resolvable:$true] %s33
      %s35 = sshll.u32 [#allocation5], 4
      %s36 = int_to_ptr.vmem [resolvable:$true] %s35
      %38 = dma.hbm_to_vmem [thread:$0]  %s34, 32, %s36, [#allocation6]
    $region13: #{tpu_custom_call.1} parent=1 // pred_fallthru
      _
    // Predicated region
    $region14: #{tpu_custom_call.1} parent=1 // pred_check
      _
    $region15: #{tpu_custom_call.1} parent=1 // pred_check_branch
      %40 = sbr.rel (0) target = $region17
    $region16: #{tpu_custom_call.1} parent=1 // pred_region
      %42 = vsyncadd [#allocation6], 0
      %s44 = sshll.u32 %s3, 4
      %s45 = int_to_ptr.hbm [resolvable:$true] %s44
      %s46 = sshll.u32 [#allocation7], 4
      %s47 = int_to_ptr.vmem [resolvable:$true] %s46
      %49 = dma.hbm_to_vmem [thread:$0]  %s45, 128, %s47, [#allocation6]
    $region17: #{tpu_custom_call.1} parent=1 // pred_fallthru
      _
    // Predicated region
    $region18: #{tpu_custom_call.1} parent=1 // pred_check
      _
    $region19: #{tpu_custom_call.1} parent=1 // pred_check_branch
      %51 = sbr.rel (0) target = $region21
    $region20: #{tpu_custom_call.1} parent=1 // pred_region
      _
    $region21: #{tpu_custom_call.1} parent=1 // pred_fallthru
      _
    // Predicated region
    $region22: #{tpu_custom_call.1} parent=1 // pred_check
      _
    $region23: #{tpu_custom_call.1} parent=1 // pred_check_branch
      %53 = sbr.rel (0) target = $region25
    $region24: #{tpu_custom_call.1} parent=1 // pred_region
      %55 = dma.done [#allocation4], 4096
    $region25: #{tpu_custom_call.1} parent=1 // pred_fallthru
      _
    // Predicated region
    $region26: #{tpu_custom_call.1} parent=1 // pred_check
      _
    $region27: #{tpu_custom_call.1} parent=1 // pred_check_branch
      %57 = sbr.rel (0) target = $region29
    $region28: #{tpu_custom_call.1} parent=1 // pred_region
      %59 = dma.done [#allocation6], 32
    $region29: #{tpu_custom_call.1} parent=1 // pred_fallthru
      _
    // Predicated region
    $region30: #{tpu_custom_call.1} parent=1 // pred_check
      _
    $region31: #{tpu_custom_call.1} parent=1 // pred_check_branch
      %61 = sbr.rel (0) target = $region33
    $region32: #{tpu_custom_call.1} parent=1 // pred_region
      %63 = dma.done [#allocation6], 128
    $region33: #{tpu_custom_call.1} parent=1 // pred_fallthru
      _
    %v64 = vld [vmem:[%s0] sm:$0x3]
    %v65 = vld [vmem:[#allocation3] sm:$0xff]
    %v66 = vld [vmem:[#allocation3 + $0x8] sm:$0xff]
    %v67 = vld [vmem:[#allocation3 + $0x10] sm:$0xff]
    %v68 = vld [vmem:[#allocation3 + $0x18] sm:$0xff]
    %v69 = vld [vmem:[#allocation3 + $0x20] sm:$0xff]
    %v70 = vld [vmem:[#allocation3 + $0x28] sm:$0xff]
    %v71 = vld [vmem:[#allocation3 + $0x30] sm:$0xff]
    %v72 = vld [vmem:[#allocation3 + $0x38] sm:$0xff]
    %v73 = vld [vmem:[#allocation3 + $0x40] sm:$0xff]
    %v74 = vld [vmem:[#allocation3 + $0x48] sm:$0xff]
    %v75 = vld [vmem:[#allocation3 + $0x50] sm:$0xff]
    %v76 = vld [vmem:[#allocation3 + $0x58] sm:$0xff]
    %v77 = vld [vmem:[#allocation3 + $0x60] sm:$0xff]
    %v78 = vld [vmem:[#allocation3 + $0x68] sm:$0xff]
    %v79 = vld [vmem:[#allocation3 + $0x70] sm:$0xff]
    %v80 = vld [vmem:[#allocation3 + $0x78] sm:$0xff]
    %v81 = vld [vmem:[#allocation3 + $0x80] sm:$0xff]
    %v82 = vld [vmem:[#allocation3 + $0x88] sm:$0xff]
    %v83 = vld [vmem:[#allocation3 + $0x90] sm:$0xff]
    %v84 = vld [vmem:[#allocation3 + $0x98] sm:$0xff]
    %v85 = vld [vmem:[#allocation3 + $0xa0] sm:$0xff]
    %v86 = vld [vmem:[#allocation3 + $0xa8] sm:$0xff]
    %v87 = vld [vmem:[#allocation3 + $0xb0] sm:$0xff]
    %v88 = vld [vmem:[#allocation3 + $0xb8] sm:$0xff]
    %v89 = vld [vmem:[#allocation3 + $0xc0] sm:$0xff]
    %v90 = vld [vmem:[#allocation3 + $0xc8] sm:$0xff]
    %v91 = vld [vmem:[#allocation3 + $0xd0] sm:$0xff]
    %v92 = vld [vmem:[#allocation3 + $0xd8] sm:$0xff]
    %v93 = vld [vmem:[#allocation3 + $0xe0] sm:$0xff]
    %v94 = vld [vmem:[#allocation3 + $0xe8] sm:$0xff]
    %v95 = vld [vmem:[#allocation3 + $0xf0] sm:$0xff]
    %v96 = vld [vmem:[#allocation3 + $0xf8] sm:$0xff]
    %v97 = vld [vmem:[#allocation5] sm:$0x3]
    %v99 = vperm.slane %v97, 0
    %v100 = vperm.slane %v97, 1
    %103 = vmatpush.msra.mxu0 %v95
    %104 = vmatpush.msra.mxu0 %v93
    %105 = vmatpush.msra.mxu0 %v91
    %106 = vmatpush.msra.mxu0 %v89
    %107 = vmatpush.msra.mxu0 %v87
    %108 = vmatpush.msra.mxu0 %v85
    %109 = vmatpush.msra.mxu0 %v83
    %110 = vmatpush.msra.mxu0 %v81
    %111 = vmatpush.msra.mxu0 %v79
    %112 = vmatpush.msra.mxu0 %v77
    %113 = vmatpush.msra.mxu0 %v75
    %114 = vmatpush.msra.mxu0 %v73
    %115 = vmatpush.msra.mxu0 %v71
    %116 = vmatpush.msra.mxu0 %v69
    %117 = vmatpush.msra.mxu0 %v67
    %118 = vmatpush.msra.mxu0 %v65
    %119 = vmatmul.f32.gmra.mxu0 %v64
    %v120 = vpop.f32.mrf.mxu0
    %v121 = vadd.f32 %v99, %v120
    %122 = vdwg.mxu0
    %123 = vmatpush.msra.mxu0 %v96
    %124 = vmatpush.msra.mxu0 %v94
    %125 = vmatpush.msra.mxu0 %v92
    %126 = vmatpush.msra.mxu0 %v90
    %127 = vmatpush.msra.mxu0 %v88
    %128 = vmatpush.msra.mxu0 %v86
    %129 = vmatpush.msra.mxu0 %v84
    %130 = vmatpush.msra.mxu0 %v82
    %131 = vmatpush.msra.mxu0 %v80
    %132 = vmatpush.msra.mxu0 %v78
    %133 = vmatpush.msra.mxu0 %v76
    %134 = vmatpush.msra.mxu0 %v74
    %135 = vmatpush.msra.mxu0 %v72
    %136 = vmatpush.msra.mxu0 %v70
    %137 = vmatpush.msra.mxu0 %v68
    %138 = vmatpush.msra.mxu0 %v66
    %139 = vmatmul.f32.gmra.mxu0 %v64
    %v140 = vpop.f32.mrf.mxu0
    %v141 = vadd.f32 %v100, %v140
    %142 = vdwg.mxu0
    %v143 = vmax.f32 %v121, 0.0
    %v144 = vmax.f32 %v141, 0.0
    %v145 = vld [vmem:[#allocation7] sm:$0xff]
    %s146 = sld [smem:[#allocation2]]
    %v147 = vstv %s146
    %149 = vst [vmem:[#allocation1] ss:$2 sm:$0xff] %v145
    %v150 = vld.sshfl [vmem:[#allocation1] sm:$0xff pattern:$0x75316420]
    %v151 = vld.sshfl [vmem:[#allocation1 + $0x8] sm:$0xff pattern:$0x75316420]
    %154 = vmatpush.xpose.msra.mxu0 0.0
    %155 = vmatpush.xpose.msra.mxu0 0.0
    %156 = vmatpush.xpose.msra.mxu0 0.0
    %157 = vmatpush.xpose.msra.mxu0 0.0
    %158 = vmatpush.xpose.msra.mxu0 0.0
    %159 = vmatpush.xpose.msra.mxu0 0.0
    %160 = vmatpush.xpose.msra.mxu0 0.0
    %161 = vmatpush.xpose.msra.mxu0 0.0
    %162 = vmatpush.xpose.msra.mxu0 0.0
    %163 = vmatpush.xpose.msra.mxu0 0.0
    %164 = vmatpush.xpose.msra.mxu0 0.0
    %165 = vmatpush.xpose.msra.mxu0 0.0
    %166 = vmatpush.xpose.msra.mxu0 0.0
    %167 = vmatpush.xpose.msra.mxu0 0.0
    %168 = vmatpush.xpose.msra.mxu0 0.0
    %169 = vmatpush.xpose.msra.mxu0 %v143
    %170 = vmatmul.f32.gmra.mxu0 %v150
    %v171 = vpop.f32.mrf.mxu0
    %v172 = vadd.f32 %v147, %v171
    %173 = vdwg.mxu0
    %174 = vmatpush.xpose.msra.mxu0 0.0
    %175 = vmatpush.xpose.msra.mxu0 0.0
    %176 = vmatpush.xpose.msra.mxu0 0.0
    %177 = vmatpush.xpose.msra.mxu0 0.0
    %178 = vmatpush.xpose.msra.mxu0 0.0
    %179 = vmatpush.xpose.msra.mxu0 0.0
    %180 = vmatpush.xpose.msra.mxu0 0.0
    %181 = vmatpush.xpose.msra.mxu0 0.0
    %182 = vmatpush.xpose.msra.mxu0 0.0
    %183 = vmatpush.xpose.msra.mxu0 0.0
    %184 = vmatpush.xpose.msra.mxu0 0.0
    %185 = vmatpush.xpose.msra.mxu0 0.0
    %186 = vmatpush.xpose.msra.mxu0 0.0
    %187 = vmatpush.xpose.msra.mxu0 0.0
    %188 = vmatpush.xpose.msra.mxu0 0.0
    %189 = vmatpush.xpose.msra.mxu0 %v144
    %190 = vmatmul.f32.gmra.mxu0 %v151
    %v191 = vpop.f32.mrf.mxu0
    %v192 = vadd.f32 %v172, %v191
    %193 = vdwg.mxu0
    %vm194 = vcmask 11264
    %195 = vst.msk [vmem:[%s5] sm:$0xf] %vm194, %v192
    // Predicated region
    $region34: #{tpu_custom_call.1} parent=1 // pred_check
      _
    $region35: #{tpu_custom_call.1} parent=1 // pred_check_branch
      %197 = sbr.rel (0) target = $region37
    $region36: #{tpu_custom_call.1} parent=1 // pred_region
      _
    $region37: #{tpu_custom_call.1} parent=1 // pred_fallthru
      _
    // Predicated region
    $region38: #{tpu_custom_call.1} parent=1 // pred_check
      _
    $region39: #{tpu_custom_call.1} parent=1 // pred_check_branch
      %199 = sbr.rel (0) target = $region41
    $region40: #{tpu_custom_call.1} parent=1 // pred_region
      _
    $region41: #{tpu_custom_call.1} parent=1 // pred_fallthru
      _
    %200 = vsyncpa [#allocation4], 1
    %201 = vsyncpa [#allocation6], 1

</llo_original>
